<compile_context>
chip_gen: v7x
topology: tpu7x:2x2x1
jax: 0.10.0
libtpu: 0.0.40
codegen_flags: <defaults>
</compile_context>

<pallas_src>
import jax
import jax.numpy as jnp
from jax.experimental import pallas as pl
from jax.experimental.pallas import tpu as pltpu


def _se_kernel(x_ref, w1t_ref, b1_ref, w2t_ref, b2_ref, o_ref):
    # x_ref: (NB, C, HW) block covering NB batch samples.
    x = x_ref[...]                                        # native dtype, no f32 copy

    # Squeeze: sum over spatial positions, f32 accumulation.
    # (The 1/HW of AdaptiveAvgPool2d(1) is folded into w1t on the host.)
    pooled = jnp.sum(x, axis=-1, dtype=jnp.float32)       # (NB, C)

    # fc1 (1x1 conv == matmul over channels), batched over NB, + ReLU.
    h = jnp.dot(pooled, w1t_ref[...],
                preferred_element_type=jnp.float32) + b1_ref[...]   # (NB, Ci)
    h = jnp.maximum(h, 0.0)

    # fc2 (1x1 conv) + HardSigmoid: relu6(x + 3) / 6.
    g = jnp.dot(h, w2t_ref[...],
                preferred_element_type=jnp.float32) + b2_ref[...]   # (NB, C)
    g = jnp.clip(g + 3.0, 0.0, 6.0) * (1.0 / 6.0)

    # Excite: per-channel scale of the identity; multiply in native dtype,
    # only the tiny (NB, C) gate is cast.
    o_ref[...] = x * g.astype(o_ref.dtype)[:, :, None]


def _choose_block_batch(N, C, HW, itemsize, vmem_budget_bytes=16 << 20):
    """Largest per-step batch NB (divisor of N) whose double-buffered input +
    output tiles fit the VMEM budget, preferring a grid of length >= 2."""
    per_sample = C * HW * itemsize
    max_nb = max(1, int(vmem_budget_bytes // (4 * per_sample)))  # 2x in + 2x out
    divisors = [d for d in range(1, N + 1) if N % d == 0]
    fits = [d for d in divisors if d <= max_nb]          # always contains 1
    pref = [d for d in fits if N // d >= 2]               # keep >=2 grid steps
    return max(pref) if pref else max(fits)


def squeeze_and_excite(x, w1, b1, w2, b2):
    """x: (N, C, H, W). w1: (Ci, C), b1: (Ci, 1), w2: (C, Ci), b2: (C, 1)."""
    N, C, H, W = x.shape
    HW = H * W
    Ci = w1.shape[0]
    x_flat = x.reshape(N, C, HW)

    # Host-side preprocessing:
    #  * fold 1/HW of the average pool into w1 (kernel only sums),
    #  * pre-transpose weights so the FCs are (NB,C)@(C,Ci) and (NB,Ci)@(Ci,C),
    #  * reshape biases to broadcast over the (NB, *) matmul results.
    w1t = (w1.astype(jnp.float32) * (1.0 / HW)).T         # (C, Ci)
    w2t = w2.astype(jnp.float32).T                         # (Ci, C)
    b1r = b1.reshape(1, Ci).astype(jnp.float32)            # (1, Ci)
    b2r = b2.reshape(1, C).astype(jnp.float32)              # (1, C)

    NB = _choose_block_batch(N, C, HW, jnp.dtype(x.dtype).itemsize)
    grid = (N // NB,)

    out_flat = pl.pallas_call(
        _se_kernel,
        out_shape=jax.ShapeDtypeStruct((N, C, HW), x.dtype),
        grid_spec=pltpu.PrefetchScalarGridSpec(
            num_scalar_prefetch=0,
            grid=grid,
            in_specs=[
                pl.BlockSpec((NB, C, HW), lambda n: (n, 0, 0)),
                pl.BlockSpec((C, Ci), lambda n: (0, 0)),
                pl.BlockSpec((1, Ci), lambda n: (0, 0)),
                pl.BlockSpec((Ci, C), lambda n: (0, 0)),
                pl.BlockSpec((1, C), lambda n: (0, 0)),
            ],
            out_specs=pl.BlockSpec((NB, C, HW), lambda n: (n, 0, 0)),
        ),
        compiler_params=pltpu.CompilerParams(
            dimension_semantics=("parallel",),
            # Raise above v5e's 16 MiB default-scoped VMEM; comfortably under
            # v7x's 64 MiB physical VMEM.
            vmem_limit_bytes=32 * 1024 * 1024,
        ),
    )(x_flat, w1t, b1r, w2t, b2r)

    return out_flat.reshape(N, C, H, W)


def _reference(x, w1, b1, w2, b2):
    # Pure-JAX reference matching the PyTorch forward.
    pooled = jnp.mean(x, axis=(2, 3), keepdims=True)                  # (N, C, 1, 1)
    h = jnp.einsum("oc,nchw->nohw", w1, pooled) + b1.reshape(1, -1, 1, 1)
    h = jnp.maximum(h, 0.0)
    g = jnp.einsum("oc,nchw->nohw", w2, h) + b2.reshape(1, -1, 1, 1)
    g = jnp.clip(g + 3.0, 0.0, 6.0) / 6.0
    return x * g


if __name__ == "__main__":
    key = jax.random.PRNGKey(0)
    N, C, H, W = 2, 16, 16, 16          # in_channels=16 -> inter_channels=4
    Ci = int(C * 0.25)

    k_x, k_w1, k_b1, k_w2, k_b2 = jax.random.split(key, 5)
    x = jax.random.normal(k_x, (N, C, H, W), dtype=jnp.float32)
    # Deterministic synthetic parameters (1x1 conv weights reshaped to 2D).
    w1 = jax.random.normal(k_w1, (Ci, C), dtype=jnp.float32) * 0.1
    b1 = jax.random.normal(k_b1, (Ci, 1), dtype=jnp.float32) * 0.1
    w2 = jax.random.normal(k_w2, (C, Ci), dtype=jnp.float32) * 0.1
    b2 = jax.random.normal(k_b2, (C, 1), dtype=jnp.float32) * 0.1

    out = squeeze_and_excite(x, w1, b1, w2, b2)
    jax.block_until_ready(out)

    ref = _reference(x, w1, b1, w2, b2)
    assert jnp.allclose(out, ref, atol=1e-5, rtol=1e-5), "mismatch vs reference"
    print("KERNEL_OK")
</pallas_src>

<mosaic_0001>
module attributes {stable_mosaic.version = 11 : i64} {
  func.func @_se_kernel(%arg0: i32, %arg1: memref<1x16x256xf32, #tpu.memory_space<vmem>>, %arg2: memref<16x4xf32, #tpu.memory_space<vmem>>, %arg3: memref<1x4xf32, #tpu.memory_space<vmem>>, %arg4: memref<4x16xf32, #tpu.memory_space<vmem>>, %arg5: memref<1x16xf32, #tpu.memory_space<vmem>>, %arg6: memref<1x16x256xf32, #tpu.memory_space<vmem>>) attributes {dimension_semantics = [#tpu.dimension_semantics<parallel>], iteration_bounds = array<i64: 2>, scalar_prefetch = 0 : i64, scratch_operands = 0 : i64, tpu.core_type = #tpu.core_type<tc>, window_params = [{transform_indices = @transform_0, window_bounds = array<i64: 1, 16, 256>}, {pipeline_mode = #tpu.pipeline_mode<synchronous>, transform_indices = @transform_1, window_bounds = array<i64: 16, 4>}, {pipeline_mode = #tpu.pipeline_mode<synchronous>, transform_indices = @transform_2, window_bounds = array<i64: 1, 4>}, {pipeline_mode = #tpu.pipeline_mode<synchronous>, transform_indices = @transform_3, window_bounds = array<i64: 4, 16>}, {pipeline_mode = #tpu.pipeline_mode<synchronous>, transform_indices = @transform_4, window_bounds = array<i64: 1, 16>}, {transform_indices = @transform_5, window_bounds = array<i64: 1, 16, 256>}]} {
    %c0 = arith.constant 0 : index
    %c0_0 = arith.constant 0 : index
    %c0_1 = arith.constant 0 : index
    %0 = vector.load %arg1[%c0, %c0_0, %c0_1] : memref<1x16x256xf32, #tpu.memory_space<vmem>>, vector<1x16x256xf32>
    %cst = arith.constant dense<0.000000e+00> : vector<1x16xf32>
    %1 = vector.multi_reduction <add>, %0, %cst [2] : vector<1x16x256xf32> to vector<1x16xf32>
    %c0_2 = arith.constant 0 : index
    %c0_3 = arith.constant 0 : index
    %2 = vector.load %arg2[%c0_2, %c0_3] : memref<16x4xf32, #tpu.memory_space<vmem>>, vector<16x4xf32>
    %cst_4 = arith.constant dense<0.000000e+00> : vector<1x4xf32>
    %3 = tpu.matmul %1, %2, %cst_4 {dimension_numbers = #tpu.dot_dimension_numbers<[1], [0], [0], [1], [0, 0, 1, 1], [], []>} : vector<1x16xf32>, vector<16x4xf32>, vector<1x4xf32> -> vector<1x4xf32>
    %c0_5 = arith.constant 0 : index
    %c0_6 = arith.constant 0 : index
    %4 = vector.load %arg3[%c0_5, %c0_6] : memref<1x4xf32, #tpu.memory_space<vmem>>, vector<1x4xf32>
    %5 = arith.addf %3, %4 : vector<1x4xf32>
    %cst_7 = arith.constant 0.000000e+00 : f32
    %6 = vector.broadcast %cst_7 : f32 to vector<1x4xf32>
    %7 = arith.maximumf %5, %6 : vector<1x4xf32>
    %c0_8 = arith.constant 0 : index
    %c0_9 = arith.constant 0 : index
    %8 = vector.load %arg4[%c0_8, %c0_9] : memref<4x16xf32, #tpu.memory_space<vmem>>, vector<4x16xf32>
    %cst_10 = arith.constant dense<0.000000e+00> : vector<1x16xf32>
    %9 = tpu.matmul %7, %8, %cst_10 {dimension_numbers = #tpu.dot_dimension_numbers<[1], [0], [0], [1], [0, 0, 1, 1], [], []>} : vector<1x4xf32>, vector<4x16xf32>, vector<1x16xf32> -> vector<1x16xf32>
    %c0_11 = arith.constant 0 : index
    %c0_12 = arith.constant 0 : index
    %10 = vector.load %arg5[%c0_11, %c0_12] : memref<1x16xf32, #tpu.memory_space<vmem>>, vector<1x16xf32>
    %11 = arith.addf %9, %10 : vector<1x16xf32>
    %cst_13 = arith.constant 3.000000e+00 : f32
    %12 = vector.broadcast %cst_13 : f32 to vector<1x16xf32>
    %13 = arith.addf %11, %12 : vector<1x16xf32>
    %cst_14 = arith.constant 0.000000e+00 : f32
    %cst_15 = arith.constant 6.000000e+00 : f32
    %14 = vector.broadcast %cst_14 : f32 to vector<1x16xf32>
    %15 = arith.maximumf %14, %13 : vector<1x16xf32>
    %16 = vector.broadcast %cst_15 : f32 to vector<1x16xf32>
    %17 = arith.minimumf %16, %15 : vector<1x16xf32>
    %cst_16 = arith.constant 0.166666672 : f32
    %18 = vector.broadcast %cst_16 : f32 to vector<1x16xf32>
    %19 = arith.mulf %17, %18 : vector<1x16xf32>
    %20 = vector.shape_cast %19 : vector<1x16xf32> to vector<1x16x1xf32>
    %21 = vector.broadcast %20 : vector<1x16x1xf32> to vector<1x16x256xf32>
    %22 = arith.mulf %0, %21 : vector<1x16x256xf32>
    %c0_17 = arith.constant 0 : index
    %c0_18 = arith.constant 0 : index
    %c0_19 = arith.constant 0 : index
    %23 = vector.load %arg6[%c0_17, %c0_18, %c0_19] : memref<1x16x256xf32, #tpu.memory_space<vmem>>, vector<1x16x256xf32>
    tpu.vector_store %arg6[%c0_17, %c0_18, %c0_19], %22 {strides = array<i32>} : memref<1x16x256xf32, #tpu.memory_space<vmem>>, vector<1x16x256xf32>,
    return
  }
  func.func @transform_0(%arg0: i32) -> (i32, i32, i32) {
    %c0_i32 = arith.constant 0 : i32
    %c0_i32_0 = arith.constant 0 : i32
    %c0_i32_1 = arith.constant 0 : i32
    return %arg0, %c0_i32, %c0_i32_0 : i32, i32, i32
  }
  func.func @transform_1(%arg0: i32) -> (i32, i32) {
    %c0_i32 = arith.constant 0 : i32
    %c0_i32_0 = arith.constant 0 : i32
    %c0_i32_1 = arith.constant 0 : i32
    return %c0_i32, %c0_i32_0 : i32, i32
  }
  func.func @transform_2(%arg0: i32) -> (i32, i32) {
    %c0_i32 = arith.constant 0 : i32
    %c0_i32_0 = arith.constant 0 : i32
    %c0_i32_1 = arith.constant 0 : i32
    return %c0_i32, %c0_i32_0 : i32, i32
  }
  func.func @transform_3(%arg0: i32) -> (i32, i32) {
    %c0_i32 = arith.constant 0 : i32
    %c0_i32_0 = arith.constant 0 : i32
    %c0_i32_1 = arith.constant 0 : i32
    return %c0_i32, %c0_i32_0 : i32, i32
  }
  func.func @transform_4(%arg0: i32) -> (i32, i32) {
    %c0_i32 = arith.constant 0 : i32
    %c0_i32_0 = arith.constant 0 : i32
    %c0_i32_1 = arith.constant 0 : i32
    return %c0_i32, %c0_i32_0 : i32, i32
  }
  func.func @transform_5(%arg0: i32) -> (i32, i32, i32) {
    %c0_i32 = arith.constant 0 : i32
    %c0_i32_0 = arith.constant 0 : i32
    %c0_i32_1 = arith.constant 0 : i32
    return %arg0, %c0_i32, %c0_i32_0 : i32, i32, i32
  }
}

</mosaic_0001>

<llo_original>
// kernel: tpu_custom_call.1
$region0: #{tpu_custom_call.1}
  #allocation0 [shape = 'u32[]', space=smem, size = 0x4, offset = 0x4, fixed_abs, tag = 'smem constant byte address 0x4 - core index']
  #allocation1 [shape = 'u32[144,128]{1,0:T(1,128)}', space=vmem, size = 0x12000, scoped, tag = 'internal scratch']
  %s0 = inlined_call_operand.hbm [shape: f32[2,16,256], index: 0, kind: input, shape index: {}]
  %s1 = inlined_call_operand.vmem [shape: f32[16,4], index: 1, kind: input, shape index: {}]
  %s2 = inlined_call_operand.vmem [shape: f32[1,4], index: 2, kind: input, shape index: {}]
  %s3 = inlined_call_operand.vmem [shape: f32[4,16], index: 3, kind: input, shape index: {}]
  %s4 = inlined_call_operand.vmem [shape: f32[1,16], index: 4, kind: input, shape index: {}]
  %s5 = inlined_call_operand.hbm [shape: f32[2,16,256], index: 5, kind: output, shape index: {}]
  %s6 = sld [smem:[#allocation0]]
  $region57: #{tpu_custom_call.1} parent=0
    _
  %s8 = ssub.s32 1, %s6
  %s9 = scalar_select 0, %s8, %s6
  $region1: #{tpu_custom_call.1} parent=0
    #allocation2 [shape = 'u8[32768]{0}', space=vmem, size = 0x8000, scoped, tag = 'input window, operand 0']
    #allocation3 [shape = 's32[2]{0}', space=sflag, size = 0x8, scoped, tag = 'scoped memory for tpu_custom_call.1']
    #allocation4 [shape = 's32[2]{0}', space=sflag, size = 0x8, scoped, tag = 'scoped memory for tpu_custom_call.1']
    #allocation5 [shape = 'u8[32768]{0}', space=vmem, size = 0x8000, scoped, tag = 'output window, operand 0']
    %10 = vsyncpa [#allocation3], 0
    %s11 = scalar_lea.sflag [#allocation3], 1
    %12 = vsyncpa %s11, 0
    %13 = vsyncpa [#allocation4], 0
    %s14 = scalar_lea.sflag [#allocation4], 1
    %15 = vsyncpa %s14, 0
    loop: start=0, step=1, limit=4
    $region2: #{tpu_custom_call.1} parent=1 // loop_pre_header
      _
    $region3: #{tpu_custom_call.1} parent=1 // loop_header
      %s17 = sphi 0, %s21
      %p18 = scmp.ge.s32.totalorder %s17, 4
      %s27 = sphi 0, %s29
      %s30 = sphi 0, %s27
      %s31 = sphi 0, %s30
      %s47 = sphi 0, %s31
      %s51 = sphi 0, %s51
      %s53 = sphi 0, %s51
      %s54 = sphi 0, %s53
      %s68 = sphi 0, %s54
      %s72 = sphi 0, %s72
      %s74 = sphi 0, %s72
      %s75 = sphi 0, %s74
      %s89 = sphi 0, %s75
      %s93 = sphi 0, %s93
      %s95 = sphi 0, %s93
      %s96 = sphi 0, %s95
      %s110 = sphi 0, %s96
      %s114 = sphi 0, %s114
      %s116 = sphi 0, %s114
      %s117 = sphi 0, %s116
      %s131 = sphi 0, %s117
      %s137 = sphi 0, %s139
      %s140 = sphi 0, %s137
      %s141 = sphi 0, %s140
      %s157 = sphi 0, %s141
    $region4: #{tpu_custom_call.1} parent=1 // loop_header_branch
      %20 = sbr.rel (%p18) target = $region8
    $region5: #{tpu_custom_call.1} parent=1 // loop_body
      %s22 = ssub.s32 %s17, 1
      %s23 = ssub.s32 %s17, 2
      %s24 = sadd.s32 %s17, 1
      %s25 = ssub.s32 %s17, %s24
      %p26 = scmp.eq.s32.totalorder %s25, 0
      %s28 = sadd.s32 %s27, 1
      %s29 = scalar_select %p26, %s27, %s28
      %p32 = pneg %p26
      %p33 = scmp.eq.s32.totalorder %s17, 1
      %p34 = por %p32, %p33
      %p35 = scmp.ne.s32.totalorder %s27, %s30
      %p36 = scmp.eq.s32.totalorder %s17, 0
      %p37 = por %p35, %p36
      %p38 = scmp.ne.s32.totalorder %s27, %s30
      %p39 = scmp.eq.s32.totalorder %s22, 1
      %p40 = por %p38, %p39
      %p41 = scmp.ne.s32.totalorder %s30, %s31
      %p42 = scmp.eq.s32.totalorder %s22, 0
      %p43 = por %p41, %p42
      %p44 = scmp.ne.s32.totalorder %s30, %s31
      %p45 = scmp.eq.s32.totalorder %s23, 1
      %p46 = por %p44, %p45
      %p48 = scmp.ne.s32.totalorder %s31, %s47
      %p49 = scmp.eq.s32.totalorder %s23, 0
      %p50 = por %p48, %p49
      %s52 = sadd.s32 %s51, 1
      %p55 = scmp.eq.s32.totalorder %s17, 1
      %p56 = scmp.ne.s32.totalorder %s51, %s53
      %p57 = scmp.eq.s32.totalorder %s17, 0
      %p58 = por %p56, %p57
      %p59 = scmp.ne.s32.totalorder %s51, %s53
      %p60 = scmp.eq.s32.totalorder %s22, 1
      %p61 = por %p59, %p60
      %p62 = scmp.ne.s32.totalorder %s53, %s54
      %p63 = scmp.eq.s32.totalorder %s22, 0
      %p64 = por %p62, %p63
      %p65 = scmp.ne.s32.totalorder %s53, %s54
      %p66 = scmp.eq.s32.totalorder %s23, 1
      %p67 = por %p65, %p66
      %p69 = scmp.ne.s32.totalorder %s54, %s68
      %p70 = scmp.eq.s32.totalorder %s23, 0
      %p71 = por %p69, %p70
      %s73 = sadd.s32 %s72, 1
      %p76 = scmp.eq.s32.totalorder %s17, 1
      %p77 = scmp.ne.s32.totalorder %s72, %s74
      %p78 = scmp.eq.s32.totalorder %s17, 0
      %p79 = por %p77, %p78
      %p80 = scmp.ne.s32.totalorder %s72, %s74
      %p81 = scmp.eq.s32.totalorder %s22, 1
      %p82 = por %p80, %p81
      %p83 = scmp.ne.s32.totalorder %s74, %s75
      %p84 = scmp.eq.s32.totalorder %s22, 0
      %p85 = por %p83, %p84
      %p86 = scmp.ne.s32.totalorder %s74, %s75
      %p87 = scmp.eq.s32.totalorder %s23, 1
      %p88 = por %p86, %p87
      %p90 = scmp.ne.s32.totalorder %s75, %s89
      %p91 = scmp.eq.s32.totalorder %s23, 0
      %p92 = por %p90, %p91
      %s94 = sadd.s32 %s93, 1
      %p97 = scmp.eq.s32.totalorder %s17, 1
      %p98 = scmp.ne.s32.totalorder %s93, %s95
      %p99 = scmp.eq.s32.totalorder %s17, 0
      %p100 = por %p98, %p99
      %p101 = scmp.ne.s32.totalorder %s93, %s95
      %p102 = scmp.eq.s32.totalorder %s22, 1
      %p103 = por %p101, %p102
      %p104 = scmp.ne.s32.totalorder %s95, %s96
      %p105 = scmp.eq.s32.totalorder %s22, 0
      %p106 = por %p104, %p105
      %p107 = scmp.ne.s32.totalorder %s95, %s96
      %p108 = scmp.eq.s32.totalorder %s23, 1
      %p109 = por %p107, %p108
      %p111 = scmp.ne.s32.totalorder %s96, %s110
      %p112 = scmp.eq.s32.totalorder %s23, 0
      %p113 = por %p111, %p112
      %s115 = sadd.s32 %s114, 1
      %p118 = scmp.eq.s32.totalorder %s17, 1
      %p119 = scmp.ne.s32.totalorder %s114, %s116
      %p120 = scmp.eq.s32.totalorder %s17, 0
      %p121 = por %p119, %p120
      %p122 = scmp.ne.s32.totalorder %s114, %s116
      %p123 = scmp.eq.s32.totalorder %s22, 1
      %p124 = por %p122, %p123
      %p125 = scmp.ne.s32.totalorder %s116, %s117
      %p126 = scmp.eq.s32.totalorder %s22, 0
      %p127 = por %p125, %p126
      %p128 = scmp.ne.s32.totalorder %s116, %s117
      %p129 = scmp.eq.s32.totalorder %s23, 1
      %p130 = por %p128, %p129
      %p132 = scmp.ne.s32.totalorder %s117, %s131
      %p133 = scmp.eq.s32.totalorder %s23, 0
      %p134 = por %p132, %p133
      %s135 = ssub.s32 %s17, %s24
      %p136 = scmp.eq.s32.totalorder %s135, 0
      %s138 = sadd.s32 %s137, 1
      %s139 = scalar_select %p136, %s137, %s138
      %p142 = pneg %p136
      %p143 = scmp.eq.s32.totalorder %s17, 1
      %p144 = por %p142, %p143
      %p145 = scmp.ne.s32.totalorder %s137, %s140
      %p146 = scmp.eq.s32.totalorder %s17, 0
      %p147 = por %p145, %p146
      %p148 = scmp.ne.s32.totalorder %s137, %s140
      %p149 = scmp.eq.s32.totalorder %s22, 1
      %p150 = por %p148, %p149
      %p151 = scmp.ne.s32.totalorder %s140, %s141
      %p152 = scmp.eq.s32.totalorder %s22, 0
      %p153 = por %p151, %p152
      %p154 = scmp.ne.s32.totalorder %s140, %s141
      %p155 = scmp.eq.s32.totalorder %s23, 1
      %p156 = por %p154, %p155
      %p158 = scmp.ne.s32.totalorder %s141, %s157
      %p159 = scmp.eq.s32.totalorder %s23, 0
      %p160 = por %p158, %p159
      %p161 = scmp.le.s32.totalorder 1, %s17
      %p162 = scmp.lt.s32.totalorder %s17, 3
      %p163 = pnand %p161, %p162
      %p164 = pneg %p163
      // Predicated region
      $region9: #{tpu_custom_call.1} parent=5 // pred_check
        _
      $region10: #{tpu_custom_call.1} parent=5 // pred_check_branch
        %166 = sbr.rel (%p163) target = $region12
      $region11: #{tpu_custom_call.1} parent=5 // pred_region
        %s167 = ssub.s32 %s17, 1
        // Predicated region
        $region13: #{tpu_custom_call.1} parent=11 // pred_check
          %p168 = pneg %p64
        $region14: #{tpu_custom_call.1} parent=11 // pred_check_branch
          %170 = sbr.rel (%p168) target = $region16
        $region15: #{tpu_custom_call.1} parent=11 // pred_region
          _
        $region16: #{tpu_custom_call.1} parent=11 // pred_fallthru
          _
        // Predicated region
        $region17: #{tpu_custom_call.1} parent=11 // pred_check
          %p171 = pneg %p85
        $region18: #{tpu_custom_call.1} parent=11 // pred_check_branch
          %173 = sbr.rel (%p171) target = $region20
        $region19: #{tpu_custom_call.1} parent=11 // pred_region
          _
        $region20: #{tpu_custom_call.1} parent=11 // pred_fallthru
          _
        // Predicated region
        $region21: #{tpu_custom_call.1} parent=11 // pred_check
          %p174 = pneg %p106
        $region22: #{tpu_custom_call.1} parent=11 // pred_check_branch
          %176 = sbr.rel (%p174) target = $region24
        $region23: #{tpu_custom_call.1} parent=11 // pred_region
          _
        $region24: #{tpu_custom_call.1} parent=11 // pred_fallthru
          _
        // Predicated region
        $region25: #{tpu_custom_call.1} parent=11 // pred_check
          %p177 = pneg %p127
        $region26: #{tpu_custom_call.1} parent=11 // pred_check_branch
          %179 = sbr.rel (%p177) target = $region28
        $region27: #{tpu_custom_call.1} parent=11 // pred_region
          _
        $region28: #{tpu_custom_call.1} parent=11 // pred_fallthru
          _
      $region12: #{tpu_custom_call.1} parent=5 // pred_fallthru
        _
      %p180 = scmp.lt.s32.totalorder %s17, 2
      // Predicated region
      $region29: #{tpu_custom_call.1} parent=5 // pred_check
        %p181 = pneg %p180
      $region30: #{tpu_custom_call.1} parent=5 // pred_check_branch
        %183 = sbr.rel (%p181) target = $region32
      $region31: #{tpu_custom_call.1} parent=5 // pred_region
        // Predicated region
        $region33: #{tpu_custom_call.1} parent=31 // pred_check
          %p184 = pneg %p37
        $region34: #{tpu_custom_call.1} parent=31 // pred_check_branch
          %186 = sbr.rel (%p184) target = $region36
        $region35: #{tpu_custom_call.1} parent=31 // pred_region
          %s187 = sand.u32 %s27, 1
          %s188 = scalar_lea.sflag [#allocation3], %s187
          %s189 = sand.u32 %s27, 1
          %s190 = smul.addr %s189, 32
          %s191 = scalar_lea.vmem [#allocation2], %s190
          %s193 = ssub.s32 512, 512
          %194 = vsyncadd %s188, %s193
          %s195 = smul.addr %s17, 4
          %s196 = smul.addr %s195, 128
          %s197 = scalar_lea.hbm %s0, %s196
          %s198 = sshll.u32 %s191, 4
          %s199 = int_to_ptr.vmem [resolvable:$true] %s198
          %204 = dma.hbm_to_vmem [thread:$0]  %s197, 512, %s199, %s188, 256, 256, 16
        $region36: #{tpu_custom_call.1} parent=31 // pred_fallthru
          _
      $region32: #{tpu_custom_call.1} parent=5 // pred_fallthru
        _
      %p205 = scmp.le.s32.totalorder 1, %s17
      %p206 = scmp.lt.s32.totalorder %s17, 3
      %p207 = pnand %p205, %p206
      %p208 = pneg %p207
      // Predicated region
      $region37: #{tpu_custom_call.1} parent=5 // pred_check
        _
      $region38: #{tpu_custom_call.1} parent=5 // pred_check_branch
        %210 = sbr.rel (%p207) target = $region40
      $region39: #{tpu_custom_call.1} parent=5 // pred_region
        %s211 = ssub.s32 %s17, 1
        %s212 = sand.u32 %s30, 1
        %s213 = scalar_lea.sflag [#allocation3], %s212
        %s214 = sand.u32 %s30, 1
        %s215 = smul.addr %s214, 32
        %s216 = scalar_lea.vmem [#allocation2], %s215
        // Predicated region
        $region41: #{tpu_custom_call.1} parent=39 // pred_check
          %p217 = pneg %p43
        $region42: #{tpu_custom_call.1} parent=39 // pred_check_branch
          %219 = sbr.rel (%p217) target = $region44
        $region43: #{tpu_custom_call.1} parent=39 // pred_region
          %220 = dma.done %s213, 512
        $region44: #{tpu_custom_call.1} parent=39 // pred_fallthru
          _
        %s221 = sand.u32 %s30, 1
        %s222 = scalar_lea.sflag [#allocation3], %s221
        %s223 = sand.u32 %s30, 1
        %s224 = smul.addr %s223, 32
        %s225 = scalar_lea.vmem [#allocation2], %s224
        %p226 = pneg %p43
        %p227 = pneg %p40
        %p228 = pneg %p64
        %p229 = pneg %p61
        %p230 = pneg %p85
        %p231 = pneg %p82
        %p232 = pneg %p106
        %p233 = pneg %p103
        %p234 = pneg %p127
        %p235 = pneg %p124
        %p236 = pneg %p153
        %p237 = pneg %p150
        %s238 = sand.u32 %s140, 1
        %s239 = scalar_lea.sflag [#allocation4], %s238
        %s240 = sand.u32 %s140, 1
        %s241 = smul.addr %s240, 32
        %s242 = scalar_lea.vmem [#allocation5], %s241
        %v243 = vld [vmem:[%s216] sm:$0xff]
        %v244 = vld [vmem:[%s216 + $0x8] sm:$0xff]
        %v245 = vld [vmem:[%s216 + $0x10] sm:$0xff]
        %v246 = vld [vmem:[%s216 + $0x18] sm:$0xff]
        %v247 = vadd.f32 %v243, %v244
        %248 = vadd.xlane.f32.xlu0 %v247
        %v249 = vpop.xlane.xlu0 %248
        %v250 = vadd.f32 %v245, %v246
        %251 = vadd.xlane.f32.xlu0 %v250
        %v252 = vpop.xlane.xlu0 %251
        %v253 = vld [vmem:[%s1] sm:$0xff]
        %v254 = vld [vmem:[%s1 + $0x8] sm:$0xff]
        %v255 = vld [vmem:[%s2] sm:$0x1]
        %v258 = vlaneseq
        %v259 = vand.u32 %v258, 127
        %v260 = vlaneseq
        %v261 = vshrl.u32 %v260, 7
        %v262 = vsub.s32 %v259, %v261
        %v263 = vrot.slane %v249, %v262
        %v264 = vadd.s32 %v259, 4294967288
        %v265 = vlaneseq
        %v266 = vshrl.u32 %v265, 7
        %v267 = vsub.s32 %v264, %v266
        %v268 = vrot.slane %v252, %v267
        %vm269 = vcmask 130112
        %v270 = vsel %vm269, %v268, %v263
        %vm271 = vcmask 130048
        %v272 = vsel %vm271, %v270, 0
        %274 = vmatprep.subr.mxu0 0.0
        %275 = vmatpush1.msra.mxu0 %v253
        %276 = vmatprep.subr.mxu0 0.0
        %277 = vmatpush1.msra.mxu0 %v254
        %278 = vmatprep.subr.mxu0 0.0
        %279 = vmatpush1.msra.mxu0 0.0
        %280 = vmatprep.subr.mxu0 0.0
        %281 = vmatpush1.msra.mxu0 0.0
        %282 = vmatprep.subr.mxu0 0.0
        %283 = vmatpush1.msra.mxu0 0.0
        %284 = vmatprep.subr.mxu0 0.0
        %285 = vmatpush1.msra.mxu0 0.0
        %286 = vmatprep.subr.mxu0 0.0
        %287 = vmatpush1.msra.mxu0 0.0
        %288 = vmatprep.subr.mxu0 0.0
        %289 = vmatpush1.msra.mxu0 0.0
        %290 = vmatprep.subr.mxu0 0.0
        %291 = vmatpush1.msra.mxu0 0.0
        %292 = vmatprep.subr.mxu0 0.0
        %293 = vmatpush1.msra.mxu0 0.0
        %294 = vmatprep.subr.mxu0 0.0
        %295 = vmatpush1.msra.mxu0 0.0
        %296 = vmatprep.subr.mxu0 0.0
        %297 = vmatpush1.msra.mxu0 0.0
        %298 = vmatprep.subr.mxu0 0.0
        %299 = vmatpush1.msra.mxu0 0.0
        %300 = vmatprep.subr.mxu0 0.0
        %301 = vmatpush1.msra.mxu0 0.0
        %302 = vmatprep.subr.mxu0 0.0
        %303 = vmatpush1.msra.mxu0 0.0
        %304 = vmatprep.subr.mxu0 0.0
        %305 = vmatpush1.msra.mxu0 0.0
        %306 = vmatprep.subr.mxu0 0.0
        %307 = vmatpush1.msra.mxu0 0.0
        %308 = vmatprep.subr.mxu0 0.0
        %309 = vmatpush1.msra.mxu0 0.0
        %310 = vmatprep.subr.mxu0 0.0
        %311 = vmatpush1.msra.mxu0 0.0
        %312 = vmatprep.subr.mxu0 0.0
        %313 = vmatpush1.msra.mxu0 0.0
        %314 = vmatprep.subr.mxu0 0.0
        %315 = vmatpush1.msra.mxu0 0.0
        %316 = vmatprep.subr.mxu0 0.0
        %317 = vmatpush1.msra.mxu0 0.0
        %318 = vmatprep.subr.mxu0 0.0
        %319 = vmatpush1.msra.mxu0 0.0
        %320 = vmatprep.subr.mxu0 0.0
        %321 = vmatpush1.msra.mxu0 0.0
        %322 = vmatprep.subr.mxu0 0.0
        %323 = vmatpush1.msra.mxu0 0.0
        %324 = vmatprep.subr.mxu0 0.0
        %325 = vmatpush1.msra.mxu0 0.0
        %326 = vmatprep.subr.mxu0 0.0
        %327 = vmatpush1.msra.mxu0 0.0
        %328 = vmatprep.subr.mxu0 0.0
        %329 = vmatpush1.msra.mxu0 0.0
        %330 = vmatprep.subr.mxu0 0.0
        %331 = vmatpush1.msra.mxu0 0.0
        %332 = vmatprep.subr.mxu0 0.0
        %333 = vmatpush1.msra.mxu0 0.0
        %334 = vmatprep.subr.mxu0 0.0
        %335 = vmatpush1.msra.mxu0 0.0
        %336 = vmatprep.subr.mxu0 0.0
        %337 = vmatpush1.msra.mxu0 0.0
        %338 = vmatprep.mubr.f32.mxu0 0.0
        %339 = vmatmul.mubr.f32.gmra.mrb[0].mxu0 %v272
        %v340 = vpop.f32.mrb[0].mxu0
        %v341 = vadd.f32 %v255, %v340
        %v342 = vpop.f32.mrb[0].mxu0
        %343 = vdwg.mxu0
        %v344 = vmax.f32 %v341, 0.0
        %v345 = vld [vmem:[%s3] sm:$0xf]
        %v346 = vld [vmem:[%s4] sm:$0x1]
        %vm347 = vcmask 31744
        %v349 = vsel %vm347, %v344, 0
        %vm351 = vcmask 1043456
        %v353 = vsel %vm351, %v345, 0
        %355 = vmatprep.subr.mxu0 0.0
        %356 = vmatpush1.msra.mxu0 %v353
        %357 = vmatprep.subr.mxu0 0.0
        %358 = vmatpush1.msra.mxu0 0.0
        %359 = vmatprep.subr.mxu0 0.0
        %360 = vmatpush1.msra.mxu0 0.0
        %361 = vmatprep.subr.mxu0 0.0
        %362 = vmatpush1.msra.mxu0 0.0
        %363 = vmatprep.subr.mxu0 0.0
        %364 = vmatpush1.msra.mxu0 0.0
        %365 = vmatprep.subr.mxu0 0.0
        %366 = vmatpush1.msra.mxu0 0.0
        %367 = vmatprep.subr.mxu0 0.0
        %368 = vmatpush1.msra.mxu0 0.0
        %369 = vmatprep.subr.mxu0 0.0
        %370 = vmatpush1.msra.mxu0 0.0
        %371 = vmatprep.subr.mxu0 0.0
        %372 = vmatpush1.msra.mxu0 0.0
        %373 = vmatprep.subr.mxu0 0.0
        %374 = vmatpush1.msra.mxu0 0.0
        %375 = vmatprep.subr.mxu0 0.0
        %376 = vmatpush1.msra.mxu0 0.0
        %377 = vmatprep.subr.mxu0 0.0
        %378 = vmatpush1.msra.mxu0 0.0
        %379 = vmatprep.subr.mxu0 0.0
        %380 = vmatpush1.msra.mxu0 0.0
        %381 = vmatprep.subr.mxu0 0.0
        %382 = vmatpush1.msra.mxu0 0.0
        %383 = vmatprep.subr.mxu0 0.0
        %384 = vmatpush1.msra.mxu0 0.0
        %385 = vmatprep.subr.mxu0 0.0
        %386 = vmatpush1.msra.mxu0 0.0
        %387 = vmatprep.subr.mxu0 0.0
        %388 = vmatpush1.msra.mxu0 0.0
        %389 = vmatprep.subr.mxu0 0.0
        %390 = vmatpush1.msra.mxu0 0.0
        %391 = vmatprep.subr.mxu0 0.0
        %392 = vmatpush1.msra.mxu0 0.0
        %393 = vmatprep.subr.mxu0 0.0
        %394 = vmatpush1.msra.mxu0 0.0
        %395 = vmatprep.subr.mxu0 0.0
        %396 = vmatpush1.msra.mxu0 0.0
        %397 = vmatprep.subr.mxu0 0.0
        %398 = vmatpush1.msra.mxu0 0.0
        %399 = vmatprep.subr.mxu0 0.0
        %400 = vmatpush1.msra.mxu0 0.0
        %401 = vmatprep.subr.mxu0 0.0
        %402 = vmatpush1.msra.mxu0 0.0
        %403 = vmatprep.subr.mxu0 0.0
        %404 = vmatpush1.msra.mxu0 0.0
        %405 = vmatprep.subr.mxu0 0.0
        %406 = vmatpush1.msra.mxu0 0.0
        %407 = vmatprep.subr.mxu0 0.0
        %408 = vmatpush1.msra.mxu0 0.0
        %409 = vmatprep.subr.mxu0 0.0
        %410 = vmatpush1.msra.mxu0 0.0
        %411 = vmatprep.subr.mxu0 0.0
        %412 = vmatpush1.msra.mxu0 0.0
        %413 = vmatprep.subr.mxu0 0.0
        %414 = vmatpush1.msra.mxu0 0.0
        %415 = vmatprep.subr.mxu0 0.0
        %416 = vmatpush1.msra.mxu0 0.0
        %417 = vmatprep.subr.mxu0 0.0
        %418 = vmatpush1.msra.mxu0 0.0
        %419 = vmatprep.mubr.f32.mxu0 0.0
        %420 = vmatmul.mubr.f32.gmra.mrb[0].mxu0 %v349
        %v421 = vpop.f32.mrb[0].mxu0
        %v422 = vadd.f32 %v346, %v421
        %v423 = vpop.f32.mrb[0].mxu0
        %424 = vdwg.mxu0
        %v425 = vadd.f32 %v422, 3.0
        %v426 = vmax.f32 %v425, 0.0
        %v427 = vmin.f32 %v426, 6.0
        %v428 = vmul.f32 %v427, 0.16666667
        %v429 = vlaneseq
        %v430 = vshrl.u32 %v429, 7
        %v431 = vsub.s32 0, %v430
        %v432 = vrot.slane %v428, %v431
        %434 = vbcast.lane.b32.xlu0 %v432, 256
        %v435 = vpop.permute.xlu0 %434
        %s437 = sor.u32 256, 8
        %438 = vbcast.lane.b32.xlu0 %v432, %s437
        %v439 = vpop.permute.xlu0 %438
        %v440 = vmul.f32 %v243, %v435
        %v441 = vmul.f32 %v244, %v435
        %v442 = vmul.f32 %v245, %v439
        %v443 = vmul.f32 %v246, %v439
        %444 = vst [vmem:[%s242] sm:$0xff] %v440
        %445 = vst [vmem:[%s242 + $0x8] sm:$0xff] %v441
        %446 = vst [vmem:[%s242 + $0x10] sm:$0xff] %v442
        %447 = vst [vmem:[%s242 + $0x18] sm:$0xff] %v443
        %s448 = sand.u32 %s140, 1
        %s449 = scalar_lea.sflag [#allocation4], %s448
        %s450 = sand.u32 %s140, 1
        %s451 = smul.addr %s450, 32
        %s452 = scalar_lea.vmem [#allocation5], %s451
        // Predicated region
        $region45: #{tpu_custom_call.1} parent=39 // pred_check
          %p453 = pneg %p150
        $region46: #{tpu_custom_call.1} parent=39 // pred_check_branch
          %455 = sbr.rel (%p453) target = $region48
        $region47: #{tpu_custom_call.1} parent=39 // pred_region
          %s457 = ssub.s32 512, 512
          %458 = vsyncadd %s449, %s457
          %s459 = smul.addr %s22, 4
          %s460 = smul.addr %s459, 128
          %s461 = scalar_lea.hbm %s5, %s460
          %s462 = sshll.u32 %s452, 4
          %s463 = int_to_ptr.vmem [resolvable:$true] %s462
          %468 = dma.vmem_to_hbm [thread:$0]  %s463, 512, %s461, %s449, 256, 256, 16
        $region48: #{tpu_custom_call.1} parent=39 // pred_fallthru
          _
      $region40: #{tpu_custom_call.1} parent=5 // pred_fallthru
        _
      %p469 = scmp.le.s32.totalorder 2, %s17
      // Predicated region
      $region49: #{tpu_custom_call.1} parent=5 // pred_check
        %p470 = pneg %p469
      $region50: #{tpu_custom_call.1} parent=5 // pred_check_branch
        %472 = sbr.rel (%p470) target = $region52
      $region51: #{tpu_custom_call.1} parent=5 // pred_region
        %s473 = ssub.s32 %s17, 2
        // Predicated region
        $region53: #{tpu_custom_call.1} parent=51 // pred_check
          %p474 = pneg %p156
        $region54: #{tpu_custom_call.1} parent=51 // pred_check_branch
          %476 = sbr.rel (%p474) target = $region56
        $region55: #{tpu_custom_call.1} parent=51 // pred_region
          %s477 = sand.u32 %s141, 1
          %s478 = scalar_lea.sflag [#allocation4], %s477
          %s479 = sand.u32 %s141, 1
          %s480 = smul.addr %s479, 32
          %s481 = scalar_lea.vmem [#allocation5], %s480
          %482 = dma.done %s478, 512
        $region56: #{tpu_custom_call.1} parent=51 // pred_fallthru
          _
      $region52: #{tpu_custom_call.1} parent=5 // pred_fallthru
        _
    $region6: #{tpu_custom_call.1} parent=1 // loop_footer
      %s21 = sadd.s32 1, %s17
    $region7: #{tpu_custom_call.1} parent=1 // loop_footer_branch
      %16 = sbr.rel target = $region3
    $region8: #{tpu_custom_call.1} parent=1 // loop_exit
      _
    %483 = vsyncpa [#allocation3], 1
    %s484 = scalar_lea.sflag [#allocation3], 1
    %485 = vsyncpa %s484, 1
    %486 = vsyncpa [#allocation4], 1
    %s487 = scalar_lea.sflag [#allocation4], 1
    %488 = vsyncpa %s487, 1

</llo_original>
